<compile_context>
chip_gen: v7x
topology: tpu7x:2x2x1
jax: 0.10.0
libtpu: 0.0.40
codegen_flags: <defaults>
</compile_context>

<pallas_src>
import jax
import jax.numpy as jnp
from jax.experimental import pallas as pl
from jax.experimental.pallas import tpu as pltpu

_LANES = 128
_BM_MAX = 4096                     # rows per block (f32 block = 2 MiB / input)
_NUM_SHARDS = 2                    # leading "parallel" axis (2 TCs on v7x)
_VMEM_LIMIT = 32 * 1024 * 1024     # fits v5e scoped default and v7x physical
_SUB_CANDIDATES = (512, 256, 128, 64, 32, 16, 8)   # inner-chunk row counts


def _round_up(x, m):
    return ((x + m - 1) // m) * m


def _make_dice_kernel(bm, bpc, total_blocks, n_valid, needs_mask, even_split, sub):
    """Kernel over a (bm, 128) block of logits / targets in native dtype.

    Output block (1, 3, 8, 128) stays resident across the reduction axis:
      [0,0]: lane/sublane partial sums of sigmoid(x) * t   (intersection)
      [0,1]: partial sums of sigmoid(x)
      [0,2]: partial sums of t
    """
    n_sub = bm // sub
    g = (sub // 8, 8, _LANES)

    def _accumulate(x_ref, t_ref, out_ref, blk, masked):
        def body(j, carry):
            acc_i, acc_s, acc_t = carry
            r0 = j * sub
            s = jax.nn.sigmoid(x_ref[pl.ds(r0, sub), :].astype(jnp.float32))
            t = t_ref[pl.ds(r0, sub), :].astype(jnp.float32)
            if masked:
                # Flat element id (uses the UNCLAMPED logical block index)
                # vs. n_valid: zero out padded rows, stale block-edge data and
                # the <128-element tail with a true select (safe vs NaN/Inf).
                rid = jax.lax.broadcasted_iota(jnp.int32, (sub, _LANES), 0)
                lid = jax.lax.broadcasted_iota(jnp.int32, (sub, _LANES), 1)
                eid = (blk * bm + r0 + rid) * _LANES + lid
                valid = eid < n_valid
                s = jnp.where(valid, s, 0.0)
                t = jnp.where(valid, t, 0.0)
            # Reduce sub rows -> 8 sublanes with pure VALU vreg adds.
            acc_i = acc_i + jnp.sum((s * t).reshape(g), axis=0)
            acc_s = acc_s + jnp.sum(s.reshape(g), axis=0)
            acc_t = acc_t + jnp.sum(t.reshape(g), axis=0)
            return acc_i, acc_s, acc_t

        zero = jnp.zeros((8, _LANES), jnp.float32)
        acc_i, acc_s, acc_t = jax.lax.fori_loop(
            0, n_sub, body, (zero, zero, zero), unroll=True)
        out_ref[0, 0] += acc_i
        out_ref[0, 1] += acc_s
        out_ref[0, 2] += acc_t

    def kernel(x_ref, t_ref, out_ref):
        p = pl.program_id(0)            # shard (parallel axis)
        i = pl.program_id(1)            # block within shard (reduction axis)

        @pl.when(i == 0)
        def _():
            out_ref[...] = jnp.zeros_like(out_ref)

        blk = p * bpc + i               # unclamped logical block index

        if needs_mask:
            is_last = blk == total_blocks - 1
            is_interior = (jnp.logical_not(is_last) if even_split
                           else blk < total_blocks - 1)

            @pl.when(is_interior)       # unmasked fast path (interior blocks)
            def _():
                _accumulate(x_ref, t_ref, out_ref, blk, masked=False)

            @pl.when(is_last)           # masked path (single partial block)
            def _():
                _accumulate(x_ref, t_ref, out_ref, blk, masked=True)
        else:
            if even_split:
                _accumulate(x_ref, t_ref, out_ref, blk, masked=False)
            else:
                @pl.when(blk < total_blocks)   # skip clamped duplicate block
                def _():
                    _accumulate(x_ref, t_ref, out_ref, blk, masked=False)

    return kernel


def _dice_sums_pallas(x2, t2, n_valid):
    """Partial sums (inter, sum_sigmoid, sum_targets) over a (rows,128) view."""
    rows = x2.shape[0]                              # static, multiple of 8 or > BM_MAX
    bm = min(_BM_MAX, rows)                         # multiple of 8, <= rows
    total_blocks = pl.cdiv(rows, bm)
    num_shards = _NUM_SHARDS if total_blocks >= _NUM_SHARDS else 1
    bpc = pl.cdiv(total_blocks, num_shards)         # blocks per shard
    even_split = (num_shards * bpc == total_blocks)
    needs_mask = (n_valid != total_blocks * bm * _LANES)
    sub = next(c for c in _SUB_CANDIDATES if bm % c == 0)

    if even_split:
        def in_map(p, i):
            return (p * bpc + i, 0)
    else:
        def in_map(p, i):
            # Clamp so the DMA never targets a block fully past the array;
            # the kernel skips compute/accumulation for that duplicate block.
            return (jnp.minimum(p * bpc + i, total_blocks - 1), 0)

    out = pl.pallas_call(
        _make_dice_kernel(bm, bpc, total_blocks, n_valid,
                          needs_mask, even_split, sub),
        out_shape=jax.ShapeDtypeStruct((num_shards, 3, 8, _LANES), jnp.float32),
        grid_spec=pltpu.PrefetchScalarGridSpec(
            num_scalar_prefetch=0,
            grid=(num_shards, bpc),
            in_specs=[
                pl.BlockSpec((bm, _LANES), in_map),
                pl.BlockSpec((bm, _LANES), in_map),
            ],
            out_specs=pl.BlockSpec((1, 3, 8, _LANES),
                                   lambda p, i: (p, 0, 0, 0)),
        ),
        compiler_params=pltpu.CompilerParams(
            dimension_semantics=("parallel", "arbitrary"),
            vmem_limit_bytes=_VMEM_LIMIT),
    )(x2, t2)

    # Final cross-shard / cross-sublane / cross-lane collapse: 3 tiny sums.
    sums = jnp.sum(out, axis=(0, 2, 3))
    return sums[0], sums[1], sums[2]


@jax.jit
def _dice_loss_jit(inputs, targets, smooth):
    x = inputs.reshape(-1)
    t = targets.reshape(-1)
    n = x.shape[0]

    if n == 0:
        dice = jnp.float32(1.0)  # (2*0 + s) / (0 + 0 + s)
    else:
        rows = pl.cdiv(n, _LANES)
        if rows <= _BM_MAX:
            padded_rows = _round_up(rows, 8)   # single full-array block
        else:
            padded_rows = rows                 # multi-block; partial last block OK
        pad = padded_rows * _LANES - n
        if pad:
            # Only when n is not already lane/sublane aligned; padded elements
            # are masked out in-kernel by the element-id mask.
            x = jnp.pad(x, (0, pad))
            t = jnp.pad(t, (0, pad))
        x2 = x.reshape(padded_rows, _LANES)
        t2 = t.reshape(padded_rows, _LANES)
        inter, s_sum, t_sum = _dice_sums_pallas(x2, t2, n)
        dice = (2.0 * inter + smooth) / (s_sum + t_sum + smooth)

    # The PyTorch module prints dice before returning; preserve under jit.
    jax.debug.print("{}", dice)
    return 1.0 - dice


def dice_loss(inputs, targets, smooth=1.0):
    """Pallas-backed DiceLoss.forward (returns the scalar loss).

    Contract: `inputs` (logits) and `targets` (masks) may be passed in narrow
    dtypes (e.g. bf16 logits, int8 masks) — the kernel reads them in native
    dtype from HBM and upcasts to f32 on the VMEM tile, minimizing HBM traffic.
    """
    return _dice_loss_jit(inputs, targets, jnp.float32(smooth))


def _reference_dice_loss(inputs, targets, smooth=1.0):
    s = jax.nn.sigmoid(inputs.astype(jnp.float32)).reshape(-1)
    t = targets.astype(jnp.float32).reshape(-1)
    inter = jnp.sum(s * t)
    dice = (2.0 * inter + smooth) / (jnp.sum(s) + jnp.sum(t) + smooth)
    return 1.0 - dice


if __name__ == "__main__":
    key = jax.random.PRNGKey(0)
    k1, k2 = jax.random.split(key)

    # Small segmentation-style logits / binary mask pair (n = 2048, aligned).
    x = jax.random.normal(k1, (2, 4, 16, 16), dtype=jnp.float32)            # logits
    y = (jax.random.uniform(k2, (2, 4, 16, 16)) > 0.5).astype(jnp.float32)  # mask

    loss = jax.block_until_ready(dice_loss(x, y))
    ref = _reference_dice_loss(x, y)
    assert jnp.allclose(loss, ref, atol=1e-5, rtol=1e-5), (loss, ref)

    # Unaligned element count (n = 1155) to exercise the masked last-block path.
    k3, k4 = jax.random.split(k1)
    xu = jax.random.normal(k3, (3, 5, 7, 11), dtype=jnp.float32)
    yu = (jax.random.uniform(k4, (3, 5, 7, 11)) > 0.5).astype(jnp.float32)
    loss_u = jax.block_until_ready(dice_loss(xu, yu))
    ref_u = _reference_dice_loss(xu, yu)
    assert jnp.allclose(loss_u, ref_u, atol=1e-5, rtol=1e-5), (loss_u, ref_u)

    print("KERNEL_OK")
</pallas_src>

<mosaic_0001>
module attributes {stable_mosaic.version = 11 : i64} {
  func.func @kernel(%arg0: i32, %arg1: i32, %arg2: memref<16x128xf32, #tpu.memory_space<vmem>>, %arg3: memref<16x128xf32, #tpu.memory_space<vmem>>, %arg4: memref<1x3x8x128xf32, #tpu.memory_space<vmem>>) attributes {dimension_semantics = [#tpu.dimension_semantics<parallel>, #tpu.dimension_semantics<arbitrary>], iteration_bounds = array<i64: 1, 1>, scalar_prefetch = 0 : i64, scratch_operands = 0 : i64, tpu.core_type = #tpu.core_type<tc>, window_params = [{transform_indices = @transform_0, window_bounds = array<i64: 16, 128>}, {transform_indices = @transform_1, window_bounds = array<i64: 16, 128>}, {transform_indices = @transform_2, window_bounds = array<i64: 1, 3, 8, 128>}]} {
    %c0_i32 = arith.constant 0 : i32
    %0 = arith.cmpi eq, %arg1, %c0_i32 : i32
    %1 = arith.extui %0 : i1 to i32
    %c0_i32_0 = arith.constant 0 : i32
    %2 = arith.cmpi ne, %1, %c0_i32_0 : i32
    scf.if %2 {
      %cst_29 = arith.constant 0.000000e+00 : f32
      %42 = vector.broadcast %cst_29 : f32 to vector<1x3x8x128xf32>
      %c0_30 = arith.constant 0 : index
      %c0_31 = arith.constant 0 : index
      %c0_32 = arith.constant 0 : index
      %c0_33 = arith.constant 0 : index
      %43 = vector.load %arg4[%c0_30, %c0_31, %c0_32, %c0_33] : memref<1x3x8x128xf32, #tpu.memory_space<vmem>>, vector<1x3x8x128xf32>
      tpu.vector_store %arg4[%c0_30, %c0_31, %c0_32, %c0_33], %42 {strides = array<i32>} : memref<1x3x8x128xf32, #tpu.memory_space<vmem>>, vector<1x3x8x128xf32>,
    } else {
    }
    %cst = arith.constant 0.000000e+00 : f32
    %3 = vector.broadcast %cst : f32 to vector<8x128xf32>
    %c0_i32_1 = arith.constant 0 : i32
    %c16_i32 = arith.constant 16 : i32
    %4 = arith.muli %c0_i32_1, %c16_i32 : i32
    %5 = arith.index_cast %4 : i32 to index
    %c0 = arith.constant 0 : index
    %6 = vector.load %arg2[%5, %c0] : memref<16x128xf32, #tpu.memory_space<vmem>>, vector<16x128xf32>
    %7 = arith.negf %6 : vector<16x128xf32>
    %8 = math.exp %7 : vector<16x128xf32>
    %cst_2 = arith.constant 1.000000e+00 : f32
    %9 = vector.broadcast %cst_2 : f32 to vector<16x128xf32>
    %10 = arith.addf %9, %8 : vector<16x128xf32>
    %11 = arith.divf %9, %10 : vector<16x128xf32>
    %12 = arith.index_cast %4 : i32 to index
    %c0_3 = arith.constant 0 : index
    %13 = vector.load %arg3[%12, %c0_3] : memref<16x128xf32, #tpu.memory_space<vmem>>, vector<16x128xf32>
    %14 = arith.mulf %11, %13 : vector<16x128xf32>
    %15 = vector.shape_cast %14 : vector<16x128xf32> to vector<2x8x128xf32>
    %cst_4 = arith.constant dense<0.000000e+00> : vector<8x128xf32>
    %16 = vector.multi_reduction <add>, %15, %cst_4 [0] : vector<2x8x128xf32> to vector<8x128xf32>
    %17 = arith.addf %3, %16 : vector<8x128xf32>
    %18 = vector.shape_cast %11 : vector<16x128xf32> to vector<2x8x128xf32>
    %cst_5 = arith.constant dense<0.000000e+00> : vector<8x128xf32>
    %19 = vector.multi_reduction <add>, %18, %cst_5 [0] : vector<2x8x128xf32> to vector<8x128xf32>
    %20 = arith.addf %3, %19 : vector<8x128xf32>
    %21 = vector.shape_cast %13 : vector<16x128xf32> to vector<2x8x128xf32>
    %cst_6 = arith.constant dense<0.000000e+00> : vector<8x128xf32>
    %22 = vector.multi_reduction <add>, %21, %cst_6 [0] : vector<2x8x128xf32> to vector<8x128xf32>
    %23 = arith.addf %3, %22 : vector<8x128xf32>
    %c1_i32 = arith.constant 1 : i32
    %c0_7 = arith.constant 0 : index
    %c0_8 = arith.constant 0 : index
    %c0_9 = arith.constant 0 : index
    %c0_10 = arith.constant 0 : index
    %24 = vector.load %arg4[%c0_7, %c0_8, %c0_9, %c0_10] : memref<1x3x8x128xf32, #tpu.memory_space<vmem>>, vector<1x1x8x128xf32>
    %25 = vector.shape_cast %24 : vector<1x1x8x128xf32> to vector<8x128xf32>
    %26 = arith.addf %25, %17 : vector<8x128xf32>
    %c0_11 = arith.constant 0 : index
    %c0_12 = arith.constant 0 : index
    %c0_13 = arith.constant 0 : index
    %c0_14 = arith.constant 0 : index
    %27 = vector.load %arg4[%c0_11, %c0_12, %c0_13, %c0_14] : memref<1x3x8x128xf32, #tpu.memory_space<vmem>>, vector<1x1x8x128xf32>
    %28 = vector.shape_cast %27 : vector<1x1x8x128xf32> to vector<8x128xf32>
    %29 = vector.shape_cast %26 : vector<8x128xf32> to vector<1x1x8x128xf32>
    tpu.vector_store %arg4[%c0_11, %c0_12, %c0_13, %c0_14], %29 {strides = array<i32>} : memref<1x3x8x128xf32, #tpu.memory_space<vmem>>, vector<1x1x8x128xf32>,
    %c0_15 = arith.constant 0 : index
    %c1 = arith.constant 1 : index
    %c0_16 = arith.constant 0 : index
    %c0_17 = arith.constant 0 : index
    %30 = vector.load %arg4[%c0_15, %c1, %c0_16, %c0_17] : memref<1x3x8x128xf32, #tpu.memory_space<vmem>>, vector<1x1x8x128xf32>
    %31 = vector.shape_cast %30 : vector<1x1x8x128xf32> to vector<8x128xf32>
    %32 = arith.addf %31, %20 : vector<8x128xf32>
    %c0_18 = arith.constant 0 : index
    %c1_19 = arith.constant 1 : index
    %c0_20 = arith.constant 0 : index
    %c0_21 = arith.constant 0 : index
    %33 = vector.load %arg4[%c0_18, %c1_19, %c0_20, %c0_21] : memref<1x3x8x128xf32, #tpu.memory_space<vmem>>, vector<1x1x8x128xf32>
    %34 = vector.shape_cast %33 : vector<1x1x8x128xf32> to vector<8x128xf32>
    %35 = vector.shape_cast %32 : vector<8x128xf32> to vector<1x1x8x128xf32>
    tpu.vector_store %arg4[%c0_18, %c1_19, %c0_20, %c0_21], %35 {strides = array<i32>} : memref<1x3x8x128xf32, #tpu.memory_space<vmem>>, vector<1x1x8x128xf32>,
    %c0_22 = arith.constant 0 : index
    %c2 = arith.constant 2 : index
    %c0_23 = arith.constant 0 : index
    %c0_24 = arith.constant 0 : index
    %36 = vector.load %arg4[%c0_22, %c2, %c0_23, %c0_24] : memref<1x3x8x128xf32, #tpu.memory_space<vmem>>, vector<1x1x8x128xf32>
    %37 = vector.shape_cast %36 : vector<1x1x8x128xf32> to vector<8x128xf32>
    %38 = arith.addf %37, %23 : vector<8x128xf32>
    %c0_25 = arith.constant 0 : index
    %c2_26 = arith.constant 2 : index
    %c0_27 = arith.constant 0 : index
    %c0_28 = arith.constant 0 : index
    %39 = vector.load %arg4[%c0_25, %c2_26, %c0_27, %c0_28] : memref<1x3x8x128xf32, #tpu.memory_space<vmem>>, vector<1x1x8x128xf32>
    %40 = vector.shape_cast %39 : vector<1x1x8x128xf32> to vector<8x128xf32>
    %41 = vector.shape_cast %38 : vector<8x128xf32> to vector<1x1x8x128xf32>
    tpu.vector_store %arg4[%c0_25, %c2_26, %c0_27, %c0_28], %41 {strides = array<i32>} : memref<1x3x8x128xf32, #tpu.memory_space<vmem>>, vector<1x1x8x128xf32>,
    return
  }
  func.func @transform_0(%arg0: i32, %arg1: i32) -> (i32, i32) {
    %c1_i32 = arith.constant 1 : i32
    %0 = arith.muli %arg0, %c1_i32 : i32
    %1 = arith.addi %0, %arg1 : i32
    %c0_i32 = arith.constant 0 : i32
    %c0_i32_0 = arith.constant 0 : i32
    return %1, %c0_i32 : i32, i32
  }
  func.func @transform_1(%arg0: i32, %arg1: i32) -> (i32, i32) {
    %c1_i32 = arith.constant 1 : i32
    %0 = arith.muli %arg0, %c1_i32 : i32
    %1 = arith.addi %0, %arg1 : i32
    %c0_i32 = arith.constant 0 : i32
    %c0_i32_0 = arith.constant 0 : i32
    return %1, %c0_i32 : i32, i32
  }
  func.func @transform_2(%arg0: i32, %arg1: i32) -> (i32, i32, i32, i32) {
    %c0_i32 = arith.constant 0 : i32
    %c0_i32_0 = arith.constant 0 : i32
    %c0_i32_1 = arith.constant 0 : i32
    %c0_i32_2 = arith.constant 0 : i32
    return %arg0, %c0_i32, %c0_i32_0, %c0_i32_1 : i32, i32, i32, i32
  }
}

</mosaic_0001>

<llo_original>
// kernel: _dice_loss_jit.1
$region0: #{_dice_loss_jit.1}
  #allocation0 [shape = 'u32[]', space=smem, size = 0x4, offset = 0x4, fixed_abs, tag = 'smem constant byte address 0x4 - core index']
  #allocation1 [shape = 'u32[144,128]{1,0:T(1,128)}', space=vmem, size = 0x12000, scoped, tag = 'internal scratch']
  %s0 = inlined_call_operand.vmem [shape: f32[16,128], index: 0, kind: input, shape index: {}]
  %s1 = inlined_call_operand.vmem [shape: f32[16,128], index: 1, kind: input, shape index: {}]
  %s2 = inlined_call_operand.vmem [shape: f32[1,3,8,128], index: 2, kind: output, shape index: {}]
  %s3 = sld [smem:[#allocation0]]
  $region22: #{_dice_loss_jit.1} parent=0
    _
  %s5 = ssub.s32 1, %s3
  %s6 = scalar_select 0, %s5, %s3
  // Predicated region
  $region2: #{_dice_loss_jit.1} parent=0 // pred_check
    _
  $region3: #{_dice_loss_jit.1} parent=0 // pred_check_branch
    %8 = sbr.rel (0) target = $region5
  $region4: #{_dice_loss_jit.1} parent=0 // pred_region
    %s9 = sadd.s32 0, 0
    %s10 = smul.u32 2, %s9
    %p11 = scmp.lt.s32.totalorder %s10, 1
    %s12 = scalar_select %p11, %s10, 1
    %s13 = smul.addr %s12, 8
    %s14 = scalar_lea.vmem %s0, %s13
    %s15 = sadd.s32 0, 0
    %s16 = smul.u32 2, %s15
  $region5: #{_dice_loss_jit.1} parent=0 // pred_fallthru
    _
  // Predicated region
  $region6: #{_dice_loss_jit.1} parent=0 // pred_check
    _
  $region7: #{_dice_loss_jit.1} parent=0 // pred_check_branch
    %18 = sbr.rel (0) target = $region9
  $region8: #{_dice_loss_jit.1} parent=0 // pred_region
    %s19 = sadd.s32 0, 0
    %s20 = smul.u32 2, %s19
    %p21 = scmp.lt.s32.totalorder %s20, 1
    %s22 = scalar_select %p21, %s20, 1
    %s23 = smul.addr %s22, 8
    %s24 = scalar_lea.vmem %s1, %s23
    %s25 = sadd.s32 0, 0
    %s26 = smul.u32 2, %s25
  $region9: #{_dice_loss_jit.1} parent=0 // pred_fallthru
    _
  %s27 = sadd.s32 0, 0
  %s28 = smul.u32 2, %s27
  %p29 = scmp.lt.s32.totalorder %s28, 1
  %s30 = scalar_select %p29, %s28, 1
  %s31 = smul.addr %s30, 8
  %s32 = scalar_lea.vmem %s0, %s31
  %s33 = sadd.s32 0, 0
  %s34 = smul.u32 2, %s33
  %p35 = scmp.lt.s32.totalorder %s34, 1
  %s36 = scalar_select %p35, %s34, 1
  %s37 = smul.addr %s36, 8
  %s38 = scalar_lea.vmem %s1, %s37
  %s39 = sadd.s32 0, 0
  %s40 = smul.u32 2, %s39
  %p41 = scmp.lt.s32.totalorder %s40, 1
  %s42 = scalar_select %p41, %s40, 1
  %s43 = smul.addr %s42, 8
  %s44 = scalar_lea.vmem %s0, %s43
  %s45 = sadd.s32 0, 0
  %s46 = smul.u32 2, %s45
  %s47 = sadd.s32 0, 0
  %s48 = smul.u32 2, %s47
  %p49 = scmp.lt.s32.totalorder %s48, 1
  %s50 = scalar_select %p49, %s48, 1
  %s51 = smul.addr %s50, 8
  %s52 = scalar_lea.vmem %s1, %s51
  %s53 = sadd.s32 0, 0
  %s54 = smul.u32 2, %s53
  %p55 = scmp.eq.s32.totalorder 0, 0
  // Predicated region
  $region10: #{_dice_loss_jit.1} parent=0 // pred_check
    %p56 = pneg %p55
  $region11: #{_dice_loss_jit.1} parent=0 // pred_check_branch
    %58 = sbr.rel (%p56) target = $region13
  $region12: #{_dice_loss_jit.1} parent=0 // pred_region
    %59 = vst [vmem:[%s2] sm:$0xff] 0.0
    %60 = vst [vmem:[%s2 + $0x8] sm:$0xff] 0.0
    %61 = vst [vmem:[%s2 + $0x10] sm:$0xff] 0.0
  $region13: #{_dice_loss_jit.1} parent=0 // pred_fallthru
    _
  %v62 = vld [vmem:[%s44] sm:$0xff]
  %v63 = vld [vmem:[%s44 + $0x8] sm:$0xff]
  %v64 = vxor.u32 %v62, 2147483648
  %v65 = vxor.u32 %v63, 2147483648
  %v66 = vmul.f32 %v64, 1.442695
  %v67 = vpow.pop %v66
  %v68 = vmul.f32 %v65, 1.442695
  %v69 = vpow.pop %v68
  %v70 = vadd.f32 %v67, 1.0
  %v71 = vadd.f32 %v69, 1.0
  %v72 = vrcp.pop %v70
  %v73 = vmul.f32 1.0, %v72
  %v74 = vrcp.pop %v71
  %v75 = vmul.f32 1.0, %v74
  %v76 = vld [vmem:[%s52] sm:$0xff]
  %v77 = vld [vmem:[%s52 + $0x8] sm:$0xff]
  %v78 = vmul.f32 %v73, %v76
  %v79 = vmul.f32 %v75, %v77
  %v80 = vadd.f32 %v78, %v79
  %v81 = vadd.f32 %v80, 0.0
  %v82 = vadd.f32 %v73, %v75
  %v83 = vadd.f32 %v82, 0.0
  %v84 = vadd.f32 %v76, %v77
  %v85 = vadd.f32 %v84, 0.0
  %v86 = vld [vmem:[%s2] sm:$0xff]
  %v87 = vadd.f32 %v86, %v81
  %88 = vst [vmem:[%s2] sm:$0xff] %v87
  %s89 = scalar_lea.vmem %s2, 8
  %v90 = vld [vmem:[%s89] sm:$0xff]
  %v91 = vadd.f32 %v90, %v83
  %92 = vst [vmem:[%s89] sm:$0xff] %v91
  %s93 = scalar_lea.vmem %s2, 16
  %v94 = vld [vmem:[%s93] sm:$0xff]
  %v95 = vadd.f32 %v94, %v85
  %96 = vst [vmem:[%s93] sm:$0xff] %v95
  // Predicated region
  $region14: #{_dice_loss_jit.1} parent=0 // pred_check
    _
  $region15: #{_dice_loss_jit.1} parent=0 // pred_check_branch
    %98 = sbr.rel (0) target = $region17
  $region16: #{_dice_loss_jit.1} parent=0 // pred_region
    _
  $region17: #{_dice_loss_jit.1} parent=0 // pred_fallthru
    _
  // Predicated region
  $region18: #{_dice_loss_jit.1} parent=0 // pred_check
    _
  $region19: #{_dice_loss_jit.1} parent=0 // pred_check_branch
    %100 = sbr.rel (0) target = $region21
  $region20: #{_dice_loss_jit.1} parent=0 // pred_region
    _
  $region21: #{_dice_loss_jit.1} parent=0 // pred_fallthru
    _

</llo_original>
